<compile_context>
chip_gen: v6e
topology: v6e:2x2x1
jax: 0.10.0
libtpu: 0.0.40
codegen_flags: <defaults>
</compile_context>

<pallas_src>
import functools

import jax
import jax.numpy as jnp
from jax.experimental import pallas as pl
from jax.experimental.pallas import tpu as pltpu


def _make_focal_kernel(alpha: float, gamma: float):
    alpha_f = float(alpha)
    gamma_f = float(gamma)
    use_int_pow = gamma_f.is_integer()

    def kernel(p_ref, t_ref, loss_ref, cnt_ref):
        s_idx = pl.program_id(1)

        # New batch element -> fresh accumulator block (distinct block per b).
        @pl.when(s_idx == 0)
        def _():
            loss_ref[...] = jnp.zeros_like(loss_ref)
            cnt_ref[...] = jnp.zeros_like(cnt_ref)

        p = p_ref[...].astype(jnp.float32)   # (1, C, TILE_HW)
        t = t_ref[...].astype(jnp.float32)   # (1, C, TILE_HW)

        # mask = target.ge(0); onehot = target * mask
        mask = (t >= 0.0).astype(jnp.float32)
        onehot = t * mask

        # Channel softmax, numerically stable. One exp per element; the divide
        # and log are taken once per pixel on the (1,1,TILE) reduced array
        # (amortized over C) instead of per element.
        m = jnp.max(p, axis=1, keepdims=True)          # (1, 1, T)
        shifted = p - m
        e = jnp.exp(shifted)                           # EUP: 1 exp / element
        denom = jnp.sum(e, axis=1, keepdims=True)      # (1, 1, T)
        inv_denom = 1.0 / denom                        # 1 divide / pixel
        log_denom = jnp.log(denom)                     # 1 log    / pixel

        probs = e * inv_denom + 1e-9                   # == softmax + 1e-9 (reference)
        log_probs = shifted - log_denom                # log-softmax ~= log(probs) (O(1e-9) diff)

        base = 1.0 - probs
        if use_int_pow:
            pow_val = jax.lax.integer_pow(base, int(gamma_f))
        else:
            # probs can exceed 1 by ~1e-9; clamp so frac-power never yields NaN.
            pow_val = jnp.power(jnp.maximum(base, 0.0), gamma_f)

        # reference: -alpha * (onehot*pow) * (onehot*log) * mask
        # mask factor is redundant (onehot already carries it); onehot is squared.
        w = (-alpha_f) * (onehot * onehot)
        loss_sum = jnp.sum(w * pow_val * log_probs)    # scalar: tile loss sum
        mask_sum = jnp.sum(mask)                       # scalar: tile valid count

        # Accumulate into the per-batch resident (1, 8, 128) output block
        # (scalar broadcast add; value replicated across the aligned tile).
        loss_ref[...] += loss_sum
        cnt_ref[...] += mask_sum

    return kernel


@functools.partial(
    jax.jit,
    static_argnames=("alpha", "gamma", "size_average", "reduce", "max_tile_hw"))
def softmax_focal_loss(predict, target, *, alpha=0.5, gamma=3.0,
                       size_average=True, reduce=False, max_tile_hw=None):
    """Pallas implementation of SoftmaxFocalLoss.forward.

    predict, target: [B, C, H, W] (NCHW, same as PyTorch).
    Returns:
      reduce=False : [B, 1] per-sample loss sums (default module behaviour)
      reduce=True  : scalar (sum / mask_count if size_average else sum / B)
    """
    B, C, H, W = predict.shape
    HW = H * W

    # Free contiguous reshape: put the (large) flattened spatial dim on lanes.
    p = predict.reshape(B, C, HW)
    t = target.reshape(B, C, HW)

    if max_tile_hw is None:
        # ~1 MiB f32 per input block -> safe with 2 inputs x 2 pipeline buffers
        # on every generation (incl. v7x's 64 MiB VMEM / 32 MiB scoped default).
        max_tile_hw = max(128, ((1 << 20) // (4 * C)) // 128 * 128)

    if HW <= max_tile_hw:
        tile = HW          # single spatial block; full-dim block needs no alignment
        nt = 1
    else:
        tile = max(128, (max_tile_hw // 128) * 128)   # lane-aligned tile
        nt = -(-HW // tile)
        pad = nt * tile - HW
        if pad:
            # predict pads with 0 (value irrelevant); target pads with -1 so
            # padded pixels are "ignored" (mask==0 -> zero loss, zero count).
            p = jnp.pad(p, ((0, 0), (0, 0), (0, pad)))
            t = jnp.pad(t, ((0, 0), (0, 0), (0, pad)), constant_values=-1.0)

    kernel = _make_focal_kernel(alpha, gamma)

    loss_out, cnt_out = pl.pallas_call(
        kernel,
        grid=(B, nt),
        in_specs=[
            pl.BlockSpec((1, C, tile), lambda b, s: (b, 0, s)),
            pl.BlockSpec((1, C, tile), lambda b, s: (b, 0, s)),
        ],
        out_specs=[
            # One aligned (8,128) tile per batch element; resident across the
            # spatial ("arbitrary") axis, distinct per b -> batch can be parallel.
            pl.BlockSpec((1, 8, 128), lambda b, s: (b, 0, 0)),
            pl.BlockSpec((1, 8, 128), lambda b, s: (b, 0, 0)),
        ],
        out_shape=[
            jax.ShapeDtypeStruct((B, 8, 128), jnp.float32),
            jax.ShapeDtypeStruct((B, 8, 128), jnp.float32),
        ],
        compiler_params=pltpu.CompilerParams(
            dimension_semantics=("parallel", "arbitrary")),
    )(p, t)

    loss_per_b = loss_out[:, 0, :1]          # (B, 1) per-batch loss sums

    if reduce:
        total = jnp.sum(loss_out[:, 0, 0])
        if size_average:
            return total / jnp.sum(cnt_out[:, 0, 0])
        return total / B
    return loss_per_b


def _reference(predict, target, alpha=0.5, gamma=3.0):
    """Pure-JAX transcription of the PyTorch forward."""
    mask = (target >= 0).astype(jnp.float32)
    onehot = target.astype(jnp.float32) * mask
    logits = jax.nn.softmax(predict, axis=1) + 1e-9
    log_data = onehot * jnp.log(logits)
    pow_data = onehot * (1.0 - logits) ** gamma
    loss = -alpha * pow_data * log_data * mask
    per_b = loss.reshape(loss.shape[0], -1).sum(axis=1)[:, None]
    return per_b, jnp.sum(mask)


def _make_inputs(key, B, C, H, W):
    k1, k2, k3 = jax.random.split(key, 3)
    predict = jax.random.normal(k1, (B, C, H, W), dtype=jnp.float32)
    # One-hot target with some "ignore" pixels marked as -1 so the mask path runs.
    cls = jax.random.randint(k2, (B, H, W), 0, C)
    onehot = jax.nn.one_hot(cls, C, axis=1, dtype=jnp.float32)      # (B, C, H, W)
    ignore = jax.random.bernoulli(k3, 0.1, (B, 1, H, W))
    target = jnp.where(ignore, -1.0, onehot)
    return predict, target


if __name__ == "__main__":
    # Case 1: default module behaviour (reduce=False) at the reference shape.
    B, C, H, W = 2, 4, 16, 16
    predict, target = _make_inputs(jax.random.PRNGKey(0), B, C, H, W)
    ref_b, ref_cnt = _reference(predict, target)

    out = jax.block_until_ready(softmax_focal_loss(predict, target))
    assert out.shape == (B, 1)
    if not bool(jnp.allclose(out, ref_b, rtol=2e-4, atol=1e-4)):
        raise AssertionError(f"reduce=False mismatch: {out} vs {ref_b}")

    out_avg = jax.block_until_ready(
        softmax_focal_loss(predict, target, reduce=True, size_average=True))
    if not bool(jnp.allclose(out_avg, jnp.sum(ref_b) / ref_cnt, rtol=2e-4, atol=1e-4)):
        raise AssertionError("reduce=True/size_average=True mismatch")

    out_bavg = jax.block_until_ready(
        softmax_focal_loss(predict, target, reduce=True, size_average=False))
    if not bool(jnp.allclose(out_bavg, jnp.sum(ref_b) / B, rtol=2e-4, atol=1e-4)):
        raise AssertionError("reduce=True/size_average=False mismatch")

    # Case 2: force a small spatial tile to exercise the multi-tile grid and
    # the -1 ignore-padding path (HW=144 -> tile=128, padded to 256, nt=2).
    B2, C2, H2, W2 = 2, 4, 12, 12
    predict2, target2 = _make_inputs(jax.random.fold_in(jax.random.PRNGKey(0), 1),
                                     B2, C2, H2, W2)
    ref2, _ = _reference(predict2, target2)
    out2 = jax.block_until_ready(
        softmax_focal_loss(predict2, target2, max_tile_hw=128))
    if not bool(jnp.allclose(out2, ref2, rtol=2e-4, atol=1e-4)):
        raise AssertionError(f"tiled/padded case mismatch: {out2} vs {ref2}")

    print("KERNEL_OK")
</pallas_src>

<mosaic_0001>
module attributes {stable_mosaic.version = 11 : i64} {
  func.func @kernel(%arg0: i32, %arg1: i32, %arg2: memref<1x4x256xf32, #tpu.memory_space<vmem>>, %arg3: memref<1x4x256xf32, #tpu.memory_space<vmem>>, %arg4: memref<1x8x128xf32, #tpu.memory_space<vmem>>, %arg5: memref<1x8x128xf32, #tpu.memory_space<vmem>>) attributes {dimension_semantics = [#tpu.dimension_semantics<parallel>, #tpu.dimension_semantics<arbitrary>], iteration_bounds = array<i64: 2, 1>, scalar_prefetch = 0 : i64, scratch_operands = 0 : i64, tpu.core_type = #tpu.core_type<tc>, window_params = [{transform_indices = @transform_0, window_bounds = array<i64: 1, 4, 256>}, {transform_indices = @transform_1, window_bounds = array<i64: 1, 4, 256>}, {transform_indices = @transform_2, window_bounds = array<i64: 1, 8, 128>}, {transform_indices = @transform_3, window_bounds = array<i64: 1, 8, 128>}]} {
    %c0_i32 = arith.constant 0 : i32
    %0 = arith.cmpi eq, %arg1, %c0_i32 : i32
    %1 = arith.extui %0 : i1 to i32
    %c0_i32_0 = arith.constant 0 : i32
    %2 = arith.cmpi ne, %1, %c0_i32_0 : i32
    scf.if %2 {
      %cst_26 = arith.constant 0.000000e+00 : f32
      %51 = vector.broadcast %cst_26 : f32 to vector<1x8x128xf32>
      %c0_27 = arith.constant 0 : index
      %c0_28 = arith.constant 0 : index
      %c0_29 = arith.constant 0 : index
      %52 = vector.load %arg4[%c0_27, %c0_28, %c0_29] : memref<1x8x128xf32, #tpu.memory_space<vmem>>, vector<1x8x128xf32>
      tpu.vector_store %arg4[%c0_27, %c0_28, %c0_29], %51 {strides = array<i32>} : memref<1x8x128xf32, #tpu.memory_space<vmem>>, vector<1x8x128xf32>,
      %cst_30 = arith.constant 0.000000e+00 : f32
      %53 = vector.broadcast %cst_30 : f32 to vector<1x8x128xf32>
      %c0_31 = arith.constant 0 : index
      %c0_32 = arith.constant 0 : index
      %c0_33 = arith.constant 0 : index
      %54 = vector.load %arg5[%c0_31, %c0_32, %c0_33] : memref<1x8x128xf32, #tpu.memory_space<vmem>>, vector<1x8x128xf32>
      tpu.vector_store %arg5[%c0_31, %c0_32, %c0_33], %53 {strides = array<i32>} : memref<1x8x128xf32, #tpu.memory_space<vmem>>, vector<1x8x128xf32>,
    } else {
    }
    %c0 = arith.constant 0 : index
    %c0_1 = arith.constant 0 : index
    %c0_2 = arith.constant 0 : index
    %3 = vector.load %arg2[%c0, %c0_1, %c0_2] : memref<1x4x256xf32, #tpu.memory_space<vmem>>, vector<1x4x256xf32>
    %c0_3 = arith.constant 0 : index
    %c0_4 = arith.constant 0 : index
    %c0_5 = arith.constant 0 : index
    %4 = vector.load %arg3[%c0_3, %c0_4, %c0_5] : memref<1x4x256xf32, #tpu.memory_space<vmem>>, vector<1x4x256xf32>
    %cst = arith.constant 0.000000e+00 : f32
    %5 = vector.broadcast %cst : f32 to vector<1x4x256xf32>
    %6 = arith.cmpf oge, %4, %5 : vector<1x4x256xf32>
    %7 = arith.extui %6 : vector<1x4x256xi1> to vector<1x4x256xi32>
    %8 = arith.sitofp %7 : vector<1x4x256xi32> to vector<1x4x256xf32>
    %9 = arith.mulf %4, %8 : vector<1x4x256xf32>
    %cst_6 = arith.constant dense<0xFF800000> : vector<1x256xf32>
    %10 = vector.multi_reduction <maximumf>, %3, %cst_6 [1] : vector<1x4x256xf32> to vector<1x256xf32>
    %11 = vector.shape_cast %10 : vector<1x256xf32> to vector<1x1x256xf32>
    %12 = vector.broadcast %11 : vector<1x1x256xf32> to vector<1x4x256xf32>
    %13 = arith.subf %3, %12 : vector<1x4x256xf32>
    %14 = math.exp %13 : vector<1x4x256xf32>
    %cst_7 = arith.constant dense<0.000000e+00> : vector<1x256xf32>
    %15 = vector.multi_reduction <add>, %14, %cst_7 [1] : vector<1x4x256xf32> to vector<1x256xf32>
    %16 = vector.shape_cast %15 : vector<1x256xf32> to vector<1x1x256xf32>
    %cst_8 = arith.constant 1.000000e+00 : f32
    %17 = vector.broadcast %cst_8 : f32 to vector<1x1x256xf32>
    %18 = arith.divf %17, %16 : vector<1x1x256xf32>
    %19 = math.log %16 : vector<1x1x256xf32>
    %20 = vector.broadcast %18 : vector<1x1x256xf32> to vector<1x4x256xf32>
    %21 = arith.mulf %14, %20 : vector<1x4x256xf32>
    %cst_9 = arith.constant 9.99999971E-10 : f32
    %22 = vector.broadcast %cst_9 : f32 to vector<1x4x256xf32>
    %23 = arith.addf %21, %22 : vector<1x4x256xf32>
    %24 = vector.broadcast %19 : vector<1x1x256xf32> to vector<1x4x256xf32>
    %25 = arith.subf %13, %24 : vector<1x4x256xf32>
    %cst_10 = arith.constant 1.000000e+00 : f32
    %26 = vector.broadcast %cst_10 : f32 to vector<1x4x256xf32>
    %27 = arith.subf %26, %23 : vector<1x4x256xf32>
    %28 = arith.mulf %27, %27 : vector<1x4x256xf32>
    %29 = arith.mulf %27, %28 : vector<1x4x256xf32>
    %30 = arith.mulf %9, %9 : vector<1x4x256xf32>
    %cst_11 = arith.constant -5.000000e-01 : f32
    %31 = vector.broadcast %cst_11 : f32 to vector<1x4x256xf32>
    %32 = arith.mulf %31, %30 : vector<1x4x256xf32>
    %33 = arith.mulf %32, %29 : vector<1x4x256xf32>
    %34 = arith.mulf %33, %25 : vector<1x4x256xf32>
    %35 = vector.shape_cast %34 : vector<1x4x256xf32> to vector<1x1x4x256xf32>
    %cst_12 = arith.constant dense<0.000000e+00> : vector<1xf32>
    %36 = vector.multi_reduction <add>, %35, %cst_12 [1, 2, 3] : vector<1x1x4x256xf32> to vector<1xf32>
    %37 = vector.shape_cast %36 : vector<1xf32> to vector<1x1x1x1xf32>
    %38 = vector.extract %37[0, 0, 0, 0] : f32 from vector<1x1x1x1xf32>
    %39 = vector.shape_cast %8 : vector<1x4x256xf32> to vector<1x1x4x256xf32>
    %cst_13 = arith.constant dense<0.000000e+00> : vector<1xf32>
    %40 = vector.multi_reduction <add>, %39, %cst_13 [1, 2, 3] : vector<1x1x4x256xf32> to vector<1xf32>
    %41 = vector.shape_cast %40 : vector<1xf32> to vector<1x1x1x1xf32>
    %42 = vector.extract %41[0, 0, 0, 0] : f32 from vector<1x1x1x1xf32>
    %c0_14 = arith.constant 0 : index
    %c0_15 = arith.constant 0 : index
    %c0_16 = arith.constant 0 : index
    %43 = vector.load %arg4[%c0_14, %c0_15, %c0_16] : memref<1x8x128xf32, #tpu.memory_space<vmem>>, vector<1x8x128xf32>
    %44 = vector.broadcast %38 : f32 to vector<1x8x128xf32>
    %45 = arith.addf %43, %44 : vector<1x8x128xf32>
    %c0_17 = arith.constant 0 : index
    %c0_18 = arith.constant 0 : index
    %c0_19 = arith.constant 0 : index
    %46 = vector.load %arg4[%c0_17, %c0_18, %c0_19] : memref<1x8x128xf32, #tpu.memory_space<vmem>>, vector<1x8x128xf32>
    tpu.vector_store %arg4[%c0_17, %c0_18, %c0_19], %45 {strides = array<i32>} : memref<1x8x128xf32, #tpu.memory_space<vmem>>, vector<1x8x128xf32>,
    %c0_20 = arith.constant 0 : index
    %c0_21 = arith.constant 0 : index
    %c0_22 = arith.constant 0 : index
    %47 = vector.load %arg5[%c0_20, %c0_21, %c0_22] : memref<1x8x128xf32, #tpu.memory_space<vmem>>, vector<1x8x128xf32>
    %48 = vector.broadcast %42 : f32 to vector<1x8x128xf32>
    %49 = arith.addf %47, %48 : vector<1x8x128xf32>
    %c0_23 = arith.constant 0 : index
    %c0_24 = arith.constant 0 : index
    %c0_25 = arith.constant 0 : index
    %50 = vector.load %arg5[%c0_23, %c0_24, %c0_25] : memref<1x8x128xf32, #tpu.memory_space<vmem>>, vector<1x8x128xf32>
    tpu.vector_store %arg5[%c0_23, %c0_24, %c0_25], %49 {strides = array<i32>} : memref<1x8x128xf32, #tpu.memory_space<vmem>>, vector<1x8x128xf32>,
    return
  }
  func.func @transform_0(%arg0: i32, %arg1: i32) -> (i32, i32, i32) {
    %c0_i32 = arith.constant 0 : i32
    %c0_i32_0 = arith.constant 0 : i32
    return %arg0, %c0_i32, %arg1 : i32, i32, i32
  }
  func.func @transform_1(%arg0: i32, %arg1: i32) -> (i32, i32, i32) {
    %c0_i32 = arith.constant 0 : i32
    %c0_i32_0 = arith.constant 0 : i32
    return %arg0, %c0_i32, %arg1 : i32, i32, i32
  }
  func.func @transform_2(%arg0: i32, %arg1: i32) -> (i32, i32, i32) {
    %c0_i32 = arith.constant 0 : i32
    %c0_i32_0 = arith.constant 0 : i32
    %c0_i32_1 = arith.constant 0 : i32
    return %arg0, %c0_i32, %c0_i32_0 : i32, i32, i32
  }
  func.func @transform_3(%arg0: i32, %arg1: i32) -> (i32, i32, i32) {
    %c0_i32 = arith.constant 0 : i32
    %c0_i32_0 = arith.constant 0 : i32
    %c0_i32_1 = arith.constant 0 : i32
    return %arg0, %c0_i32, %c0_i32_0 : i32, i32, i32
  }
}

</mosaic_0001>

<llo_original>
// kernel: softmax_focal_loss.1
$region0: #{softmax_focal_loss.1}
  #allocation0 [shape = 'u32[]', space=smem, size = 0x4, offset = 0x4, fixed_abs, tag = 'smem constant byte address 0x4 - core index']
  #allocation1 [shape = 'u32[144,128]{1,0:T(1,128)}', space=vmem, size = 0x12000, scoped, tag = 'internal scratch']
  %s0 = inlined_call_operand.vmem [shape: f32[2,4,256], index: 0, kind: input, shape index: {}]
  %s1 = inlined_call_operand.vmem [shape: f32[2,4,256], index: 1, kind: input, shape index: {}]
  %s2 = inlined_call_operand.vmem [shape: f32[2,8,128], index: 2, kind: output, shape index: {0}]
  %s3 = inlined_call_operand.hbm [shape: f32[2,8,128], index: 3, kind: output, shape index: {1}]
  %4 = xla_tuple %s2, %s3
  %s5 = sld [smem:[#allocation0]]
  $region53: #{softmax_focal_loss.1} parent=0
    _
  %s7 = ssub.s32 1, %s5
  %s8 = scalar_select 0, %s7, %s5
  $region1: #{softmax_focal_loss.1} parent=0
    #allocation2 [shape = 'u8[8192]{0}', space=vmem, size = 0x2000, scoped, tag = 'output window, operand 1']
    #allocation3 [shape = 's32[2]{0}', space=sflag, size = 0x8, scoped, tag = 'scoped memory for softmax_focal_loss.1']
    %9 = vsyncpa [#allocation3], 0
    %s10 = scalar_lea.sflag [#allocation3], 1
    %11 = vsyncpa %s10, 0
    loop: start=0, step=1, limit=4
    $region2: #{softmax_focal_loss.1} parent=1 // loop_pre_header
      _
    $region3: #{softmax_focal_loss.1} parent=1 // loop_header
      %s13 = sphi 0, %s17
      %p14 = scmp.ge.s32.totalorder %s13, 4
      %s20 = sphi 0, %s32
      %s21 = sphi 0, %s28
      %s22 = sphi 0, %s20
      %s23 = sphi 0, %s21
      %s24 = sphi 0, %s22
      %s25 = sphi 0, %s23
      %s37 = sphi 0, %s39
      %s40 = sphi 0, %s37
      %s41 = sphi 0, %s40
      %s57 = sphi 0, %s41
      %s65 = sphi 0, %s67
      %s68 = sphi 0, %s65
      %s69 = sphi 0, %s68
      %s85 = sphi 0, %s69
      %s91 = sphi 0, %s93
      %s94 = sphi 0, %s91
      %s95 = sphi 0, %s94
      %s111 = sphi 0, %s95
      %s117 = sphi 0, %s119
      %s120 = sphi 0, %s117
      %s121 = sphi 0, %s120
      %s137 = sphi 0, %s121
    $region4: #{softmax_focal_loss.1} parent=1 // loop_header_branch
      %16 = sbr.rel (%p14) target = $region8
    $region5: #{softmax_focal_loss.1} parent=1 // loop_body
      %s18 = ssub.s32 %s13, 1
      %s19 = ssub.s32 %s13, 2
      %s26 = sadd.s32 1, %s21
      %p27 = scmp.ge.s32.totalorder %s26, 1
      %s28 = scalar_select %p27, 0, %s26
      %s29 = sadd.s32 1, %s20
      %s30 = scalar_select %p27, %s29, %s20
      %p31 = scmp.ge.s32.totalorder %s30, 2
      %s32 = scalar_select %p31, 0, %s30
      %s33 = ssub.s32 %s20, %s32
      %s34 = ssub.s32 %s21, %s28
      %s35 = sor.u32 %s33, %s34
      %p36 = scmp.eq.s32.totalorder %s35, 0
      %s38 = sadd.s32 %s37, 1
      %s39 = scalar_select %p36, %s37, %s38
      %p42 = pneg %p36
      %p43 = scmp.eq.s32.totalorder %s13, 1
      %p44 = por %p42, %p43
      %p45 = scmp.ne.s32.totalorder %s37, %s40
      %p46 = scmp.eq.s32.totalorder %s13, 0
      %p47 = por %p45, %p46
      %p48 = scmp.ne.s32.totalorder %s37, %s40
      %p49 = scmp.eq.s32.totalorder %s18, 1
      %p50 = por %p48, %p49
      %p51 = scmp.ne.s32.totalorder %s40, %s41
      %p52 = scmp.eq.s32.totalorder %s18, 0
      %p53 = por %p51, %p52
      %p54 = scmp.ne.s32.totalorder %s40, %s41
      %p55 = scmp.eq.s32.totalorder %s19, 1
      %p56 = por %p54, %p55
      %p58 = scmp.ne.s32.totalorder %s41, %s57
      %p59 = scmp.eq.s32.totalorder %s19, 0
      %p60 = por %p58, %p59
      %s61 = ssub.s32 %s20, %s32
      %s62 = ssub.s32 %s21, %s28
      %s63 = sor.u32 %s61, %s62
      %p64 = scmp.eq.s32.totalorder %s63, 0
      %s66 = sadd.s32 %s65, 1
      %s67 = scalar_select %p64, %s65, %s66
      %p70 = pneg %p64
      %p71 = scmp.eq.s32.totalorder %s13, 1
      %p72 = por %p70, %p71
      %p73 = scmp.ne.s32.totalorder %s65, %s68
      %p74 = scmp.eq.s32.totalorder %s13, 0
      %p75 = por %p73, %p74
      %p76 = scmp.ne.s32.totalorder %s65, %s68
      %p77 = scmp.eq.s32.totalorder %s18, 1
      %p78 = por %p76, %p77
      %p79 = scmp.ne.s32.totalorder %s68, %s69
      %p80 = scmp.eq.s32.totalorder %s18, 0
      %p81 = por %p79, %p80
      %p82 = scmp.ne.s32.totalorder %s68, %s69
      %p83 = scmp.eq.s32.totalorder %s19, 1
      %p84 = por %p82, %p83
      %p86 = scmp.ne.s32.totalorder %s69, %s85
      %p87 = scmp.eq.s32.totalorder %s19, 0
      %p88 = por %p86, %p87
      %s89 = ssub.s32 %s20, %s32
      %p90 = scmp.eq.s32.totalorder %s89, 0
      %s92 = sadd.s32 %s91, 1
      %s93 = scalar_select %p90, %s91, %s92
      %p96 = pneg %p90
      %p97 = scmp.eq.s32.totalorder %s13, 1
      %p98 = por %p96, %p97
      %p99 = scmp.ne.s32.totalorder %s91, %s94
      %p100 = scmp.eq.s32.totalorder %s13, 0
      %p101 = por %p99, %p100
      %p102 = scmp.ne.s32.totalorder %s91, %s94
      %p103 = scmp.eq.s32.totalorder %s18, 1
      %p104 = por %p102, %p103
      %p105 = scmp.ne.s32.totalorder %s94, %s95
      %p106 = scmp.eq.s32.totalorder %s18, 0
      %p107 = por %p105, %p106
      %p108 = scmp.ne.s32.totalorder %s94, %s95
      %p109 = scmp.eq.s32.totalorder %s19, 1
      %p110 = por %p108, %p109
      %p112 = scmp.ne.s32.totalorder %s95, %s111
      %p113 = scmp.eq.s32.totalorder %s19, 0
      %p114 = por %p112, %p113
      %s115 = ssub.s32 %s20, %s32
      %p116 = scmp.eq.s32.totalorder %s115, 0
      %s118 = sadd.s32 %s117, 1
      %s119 = scalar_select %p116, %s117, %s118
      %p122 = pneg %p116
      %p123 = scmp.eq.s32.totalorder %s13, 1
      %p124 = por %p122, %p123
      %p125 = scmp.ne.s32.totalorder %s117, %s120
      %p126 = scmp.eq.s32.totalorder %s13, 0
      %p127 = por %p125, %p126
      %p128 = scmp.ne.s32.totalorder %s117, %s120
      %p129 = scmp.eq.s32.totalorder %s18, 1
      %p130 = por %p128, %p129
      %p131 = scmp.ne.s32.totalorder %s120, %s121
      %p132 = scmp.eq.s32.totalorder %s18, 0
      %p133 = por %p131, %p132
      %p134 = scmp.ne.s32.totalorder %s120, %s121
      %p135 = scmp.eq.s32.totalorder %s19, 1
      %p136 = por %p134, %p135
      %p138 = scmp.ne.s32.totalorder %s121, %s137
      %p139 = scmp.eq.s32.totalorder %s19, 0
      %p140 = por %p138, %p139
      %p141 = scmp.le.s32.totalorder 1, %s13
      %p142 = scmp.lt.s32.totalorder %s13, 3
      %p143 = pnand %p141, %p142
      %p144 = pneg %p143
      // Predicated region
      $region9: #{softmax_focal_loss.1} parent=5 // pred_check
        _
      $region10: #{softmax_focal_loss.1} parent=5 // pred_check_branch
        %146 = sbr.rel (%p143) target = $region12
      $region11: #{softmax_focal_loss.1} parent=5 // pred_region
        %s147 = ssub.s32 %s13, 1
      $region12: #{softmax_focal_loss.1} parent=5 // pred_fallthru
        _
      %p148 = scmp.lt.s32.totalorder %s13, 2
      // Predicated region
      $region13: #{softmax_focal_loss.1} parent=5 // pred_check
        %p149 = pneg %p148
      $region14: #{softmax_focal_loss.1} parent=5 // pred_check_branch
        %151 = sbr.rel (%p149) target = $region16
      $region15: #{softmax_focal_loss.1} parent=5 // pred_region
        // Predicated region
        $region17: #{softmax_focal_loss.1} parent=15 // pred_check
          %p152 = pneg %p47
        $region18: #{softmax_focal_loss.1} parent=15 // pred_check_branch
          %154 = sbr.rel (%p152) target = $region20
        $region19: #{softmax_focal_loss.1} parent=15 // pred_region
          %s155 = smul.u32 2, %s21
          %p156 = scmp.lt.s32.totalorder %s20, 1
          %s157 = scalar_select %p156, %s20, 1
          %p158 = scmp.lt.s32.totalorder %s155, 1
          %s159 = scalar_select %p158, %s155, 1
          %s160 = smul.addr %s157, 2
          %s161 = sadd.s32 %s159, %s160
          %s162 = smul.addr %s161, 4
          %s163 = scalar_lea.vmem %s0, %s162
          %s164 = smul.u32 2, %s21
        $region20: #{softmax_focal_loss.1} parent=15 // pred_fallthru
          _
        // Predicated region
        $region21: #{softmax_focal_loss.1} parent=15 // pred_check
          %p165 = pneg %p75
        $region22: #{softmax_focal_loss.1} parent=15 // pred_check_branch
          %167 = sbr.rel (%p165) target = $region24
        $region23: #{softmax_focal_loss.1} parent=15 // pred_region
          %s168 = smul.u32 2, %s21
          %p169 = scmp.lt.s32.totalorder %s20, 1
          %s170 = scalar_select %p169, %s20, 1
          %p171 = scmp.lt.s32.totalorder %s168, 1
          %s172 = scalar_select %p171, %s168, 1
          %s173 = smul.addr %s170, 2
          %s174 = sadd.s32 %s172, %s173
          %s175 = smul.addr %s174, 4
          %s176 = scalar_lea.vmem %s1, %s175
          %s177 = smul.u32 2, %s21
        $region24: #{softmax_focal_loss.1} parent=15 // pred_fallthru
          _
      $region16: #{softmax_focal_loss.1} parent=5 // pred_fallthru
        _
      %p178 = scmp.le.s32.totalorder 1, %s13
      %p179 = scmp.lt.s32.totalorder %s13, 3
      %p180 = pnand %p178, %p179
      %p181 = pneg %p180
      // Predicated region
      $region25: #{softmax_focal_loss.1} parent=5 // pred_check
        _
      $region26: #{softmax_focal_loss.1} parent=5 // pred_check_branch
        %183 = sbr.rel (%p180) target = $region28
      $region27: #{softmax_focal_loss.1} parent=5 // pred_region
        %s184 = ssub.s32 %s13, 1
        %s185 = smul.u32 2, %s23
        %p186 = scmp.lt.s32.totalorder %s22, 1
        %s187 = scalar_select %p186, %s22, 1
        %p188 = scmp.lt.s32.totalorder %s185, 1
        %s189 = scalar_select %p188, %s185, 1
        %s190 = smul.addr %s187, 2
        %s191 = sadd.s32 %s189, %s190
        %s192 = smul.addr %s191, 4
        %s193 = scalar_lea.vmem %s0, %s192
        %p194 = pneg %p53
        %p195 = pneg %p50
        %s196 = smul.u32 2, %s23
        %p197 = scmp.lt.s32.totalorder %s22, 1
        %s198 = scalar_select %p197, %s22, 1
        %p199 = scmp.lt.s32.totalorder %s196, 1
        %s200 = scalar_select %p199, %s196, 1
        %s201 = smul.addr %s198, 2
        %s202 = sadd.s32 %s200, %s201
        %s203 = smul.addr %s202, 4
        %s204 = scalar_lea.vmem %s1, %s203
        %p205 = pneg %p81
        %p206 = pneg %p78
        %p207 = pneg %p107
        %p208 = pneg %p104
        %p209 = scmp.lt.s32.totalorder %s22, 1
        %s210 = scalar_select %p209, %s22, 1
        %s211 = smul.addr %s210, 8
        %s212 = scalar_lea.vmem %s2, %s211
        %p213 = pneg %p133
        %p214 = pneg %p130
        %s215 = sand.u32 %s120, 1
        %s216 = scalar_lea.sflag [#allocation3], %s215
        %s217 = sand.u32 %s120, 1
        %s218 = smul.addr %s217, 8
        %s219 = scalar_lea.vmem [#allocation2], %s218
        %s220 = smul.u32 2, %s23
        %p221 = scmp.lt.s32.totalorder %s22, 1
        %s222 = scalar_select %p221, %s22, 1
        %p223 = scmp.lt.s32.totalorder %s220, 1
        %s224 = scalar_select %p223, %s220, 1
        %s225 = smul.addr %s222, 2
        %s226 = sadd.s32 %s224, %s225
        %s227 = smul.addr %s226, 4
        %s228 = scalar_lea.vmem %s0, %s227
        %s229 = smul.u32 2, %s23
        %s230 = smul.u32 2, %s23
        %p231 = scmp.lt.s32.totalorder %s22, 1
        %s232 = scalar_select %p231, %s22, 1
        %p233 = scmp.lt.s32.totalorder %s230, 1
        %s234 = scalar_select %p233, %s230, 1
        %s235 = smul.addr %s232, 2
        %s236 = sadd.s32 %s234, %s235
        %s237 = smul.addr %s236, 4
        %s238 = scalar_lea.vmem %s1, %s237
        %s239 = smul.u32 2, %s23
        %p240 = scmp.lt.s32.totalorder %s22, 1
        %s241 = scalar_select %p240, %s22, 1
        %s242 = smul.addr %s241, 8
        %s243 = scalar_lea.vmem %s2, %s242
        %p244 = scmp.eq.s32.totalorder %s23, 0
        // Predicated region
        $region29: #{softmax_focal_loss.1} parent=27 // pred_check
          %p245 = pneg %p244
        $region30: #{softmax_focal_loss.1} parent=27 // pred_check_branch
          %247 = sbr.rel (%p245) target = $region32
        $region31: #{softmax_focal_loss.1} parent=27 // pred_region
          %248 = vst [vmem:[%s243] sm:$0xff] 0.0
          %249 = vst [vmem:[%s219] sm:$0xff] 0.0
        $region32: #{softmax_focal_loss.1} parent=27 // pred_fallthru
          _
        %v250 = vld [vmem:[%s228] sm:$0xff]
        %v251 = vld [vmem:[%s238] sm:$0xff]
        %vm252 = vcmp.ge.f32.partialorder %v251, 0.0
        %v253 = vsel %vm252, 1, 0
        %v254 = vcvt.s32.f32 %v253
        %v255 = vmul.f32 %v251, %v254
        %v257 = vcombine.high %v250, %v250
        %vm259 = vcmask 1043456
        %v260 = vsel %vm259, %v250, -inf
        %v261 = vrot.slane %v260, 4
        %v262 = vmax.f32 %v260, %v261
        %v263 = vrot.slane %v262, 2
        %v264 = vmax.f32 %v262, %v263
        %v265 = vrot.slane %v264, 1
        %v266 = vmax.f32 %v264, %v265
        %v267 = vsel %vm259, %v257, -inf
        %v268 = vrot.slane %v267, 4
        %v269 = vmax.f32 %v267, %v268
        %v270 = vrot.slane %v269, 2
        %v271 = vmax.f32 %v269, %v270
        %v272 = vrot.slane %v271, 1
        %v273 = vmax.f32 %v271, %v272
        %v276 = vcombine.low %v266, %v273
        %v278 = vsub.f32 %v250, %v276
        %v279 = vmul.f32 %v278, 1.442695
        %v280 = vpow.pop %v279
        %v282 = vcombine.high %v280, %v280
        %v284 = vsel %vm259, %v280, 0.0
        %v285 = vrot.slane %v284, 4
        %v286 = vadd.f32 %v284, %v285
        %v287 = vrot.slane %v286, 2
        %v288 = vadd.f32 %v286, %v287
        %v289 = vrot.slane %v288, 1
        %v290 = vadd.f32 %v288, %v289
        %v291 = vsel %vm259, %v282, 0.0
        %v292 = vrot.slane %v291, 4
        %v293 = vadd.f32 %v291, %v292
        %v294 = vrot.slane %v293, 2
        %v295 = vadd.f32 %v293, %v294
        %v296 = vrot.slane %v295, 1
        %v297 = vadd.f32 %v295, %v296
        %v298 = vrcp.pop %v290
        %v299 = vmul.f32 1.0, %v298
        %v300 = vrcp.pop %v297
        %v301 = vmul.f32 1.0, %v300
        %v302 = vlog2.pop %v290
        %v303 = vmul.f32 %v302, 0.6931472
        %v304 = vlog2.pop %v297
        %v305 = vmul.f32 %v304, 0.6931472
        %v308 = vcombine.low %v299, %v301
        %v310 = vmul.f32 %v280, %v308
        %v311 = vadd.f32 %v310, 1e-09
        %v314 = vcombine.low %v303, %v305
        %v316 = vsub.f32 %v278, %v314
        %v317 = vsub.f32 1.0, %v311
        %v318 = vmul.f32 %v317, %v317
        %v319 = vmul.f32 %v317, %v318
        %v320 = vmul.f32 %v255, %v255
        %v321 = vmul.f32 %v320, -0.5
        %v322 = vmul.f32 %v321, %v319
        %v323 = vmul.f32 %v322, %v316
        %v325 = vcombine.high %v323, %v323
        %v327 = vsel %vm259, %v323, 0.0
        %v328 = vsel %vm259, %v325, 0.0
        %v329 = vadd.f32 %v327, %v328
        %330 = vadd.xlane.f32.xlu0 %v329
        %v331 = vpop.xlane.xlu0 %330
        %v332 = vrot.slane %v331, 4
        %v333 = vadd.f32 %v331, %v332
        %v334 = vrot.slane %v333, 2
        %v335 = vadd.f32 %v333, %v334
        %v336 = vrot.slane %v335, 1
        %v337 = vadd.f32 %v335, %v336
        %s338 = vtos %v337
        %v340 = vcombine.high %v254, %v254
        %v342 = vsel %vm259, %v254, 0.0
        %v343 = vsel %vm259, %v340, 0.0
        %v344 = vadd.f32 %v342, %v343
        %345 = vadd.xlane.f32.xlu0 %v344
        %v346 = vpop.xlane.xlu0 %345
        %v347 = vrot.slane %v346, 4
        %v348 = vadd.f32 %v346, %v347
        %v349 = vrot.slane %v348, 2
        %v350 = vadd.f32 %v348, %v349
        %v351 = vrot.slane %v350, 1
        %v352 = vadd.f32 %v350, %v351
        %s353 = vtos %v352
        %v354 = vld [vmem:[%s243] sm:$0xff]
        %v355 = vstv %s338
        %v356 = vadd.f32 %v354, %v355
        %357 = vst [vmem:[%s243] sm:$0xff] %v356
        %v358 = vld [vmem:[%s219] sm:$0xff]
        %v359 = vstv %s353
        %v360 = vadd.f32 %v358, %v359
        %361 = vst [vmem:[%s219] sm:$0xff] %v360
        %p362 = scmp.lt.s32.totalorder %s22, 1
        %s363 = scalar_select %p362, %s22, 1
        %s364 = smul.addr %s363, 8
        %s365 = scalar_lea.vmem %s2, %s364
        %s366 = sand.u32 %s120, 1
        %s367 = scalar_lea.sflag [#allocation3], %s366
        %s368 = sand.u32 %s120, 1
        %s369 = smul.addr %s368, 8
        %s370 = scalar_lea.vmem [#allocation2], %s369
        // Predicated region
        $region33: #{softmax_focal_loss.1} parent=27 // pred_check
          %p371 = pneg %p104
        $region34: #{softmax_focal_loss.1} parent=27 // pred_check_branch
          %373 = sbr.rel (%p371) target = $region36
        $region35: #{softmax_focal_loss.1} parent=27 // pred_region
          _
        $region36: #{softmax_focal_loss.1} parent=27 // pred_fallthru
          _
        // Predicated region
        $region37: #{softmax_focal_loss.1} parent=27 // pred_check
          %p374 = pneg %p130
        $region38: #{softmax_focal_loss.1} parent=27 // pred_check_branch
          %376 = sbr.rel (%p374) target = $region40
        $region39: #{softmax_focal_loss.1} parent=27 // pred_region
          %s378 = ssub.s32 128, 128
          %379 = vsyncadd %s367, %s378
          %s380 = smul.addr %s22, 128
          %s381 = scalar_lea.hbm %s3, %s380
          %s383 = sshll.u32 %s370, 4
          %s384 = int_to_ptr.vmem [resolvable:$true] %s383
          %386 = dma.vmem_to_hbm [thread:$0]  %s384, 128, %s381, %s367
        $region40: #{softmax_focal_loss.1} parent=27 // pred_fallthru
          _
      $region28: #{softmax_focal_loss.1} parent=5 // pred_fallthru
        _
      %p387 = scmp.le.s32.totalorder 2, %s13
      // Predicated region
      $region41: #{softmax_focal_loss.1} parent=5 // pred_check
        %p388 = pneg %p387
      $region42: #{softmax_focal_loss.1} parent=5 // pred_check_branch
        %390 = sbr.rel (%p388) target = $region44
      $region43: #{softmax_focal_loss.1} parent=5 // pred_region
        %s391 = ssub.s32 %s13, 2
        // Predicated region
        $region45: #{softmax_focal_loss.1} parent=43 // pred_check
          %p392 = pneg %p110
        $region46: #{softmax_focal_loss.1} parent=43 // pred_check_branch
          %394 = sbr.rel (%p392) target = $region48
        $region47: #{softmax_focal_loss.1} parent=43 // pred_region
          %p395 = scmp.lt.s32.totalorder %s24, 1
          %s396 = scalar_select %p395, %s24, 1
          %s397 = smul.addr %s396, 8
          %s398 = scalar_lea.vmem %s2, %s397
        $region48: #{softmax_focal_loss.1} parent=43 // pred_fallthru
          _
        // Predicated region
        $region49: #{softmax_focal_loss.1} parent=43 // pred_check
          %p399 = pneg %p136
        $region50: #{softmax_focal_loss.1} parent=43 // pred_check_branch
          %401 = sbr.rel (%p399) target = $region52
        $region51: #{softmax_focal_loss.1} parent=43 // pred_region
          %s402 = sand.u32 %s121, 1
          %s403 = scalar_lea.sflag [#allocation3], %s402
          %s404 = sand.u32 %s121, 1
          %s405 = smul.addr %s404, 8
          %s406 = scalar_lea.vmem [#allocation2], %s405
          %407 = dma.done %s403, 128
        $region52: #{softmax_focal_loss.1} parent=43 // pred_fallthru
          _
      $region44: #{softmax_focal_loss.1} parent=5 // pred_fallthru
        _
    $region6: #{softmax_focal_loss.1} parent=1 // loop_footer
      %s17 = sadd.s32 1, %s13
    $region7: #{softmax_focal_loss.1} parent=1 // loop_footer_branch
      %12 = sbr.rel target = $region3
    $region8: #{softmax_focal_loss.1} parent=1 // loop_exit
      _
    %408 = vsyncpa [#allocation3], 1
    %s409 = scalar_lea.sflag [#allocation3], 1
    %410 = vsyncpa %s409, 1

</llo_original>
